<compile_context>
chip_gen: v5e
topology: v5e:2x2
jax: 0.10.0
libtpu: 0.0.40
codegen_flags: <defaults>
</compile_context>

<pallas_src>
import jax
import jax.numpy as jnp
from jax.experimental import pallas as pl
from jax.experimental.pallas import tpu as pltpu


# ----------------------------------------------------------------------------
# Fused Pallas kernel: all RNN layers + all timesteps + ReLU + FC head
# ----------------------------------------------------------------------------
def make_fused_rnn_kernel(n_layers, seq_len, batch):
    T, B = seq_len, batch

    def kernel(*refs):
        # in_refs..., out_refs..., scratch_refs...
        x_ref = refs[0]                          # (T*B, F)   time-major, flat
        h0_ref = refs[1]                         # (n_layers, B, H)
        layer_refs = refs[2:2 + 3 * n_layers]    # per layer: W_ih^T, W_hh^T, b
        fc_w_ref = refs[2 + 3 * n_layers]        # (H, O)
        fc_b_ref = refs[3 + 3 * n_layers]        # (1, O)
        out_ref = refs[4 + 3 * n_layers]         # (B, O)
        hn_ref = refs[5 + 3 * n_layers]          # (n_layers, B, H)
        act_ref = refs[6 + 3 * n_layers]         # VMEM scratch (T*B, H)

        h = None
        for l in range(n_layers):
            wih = layer_refs[3 * l][...]         # (F_in, H)
            whh = layer_refs[3 * l + 1][...]     # (H, H)
            b = layer_refs[3 * l + 2][...]       # (1, H)  == b_ih + b_hh

            # Hoisted input projection for ALL timesteps at once (one big
            # matmul, combined bias folded in) -- off the serial path.
            x_in = x_ref[...] if l == 0 else act_ref[...]
            proj = jnp.dot(x_in, wih, preferred_element_type=jnp.float32) + b

            # Serial recurrence: only h @ W_hh^T + tanh stays per-step.
            h = h0_ref[l]                        # (B, H)
            for t in range(T):                   # static trip count -> unrolled
                h = jnp.tanh(
                    proj[t * B:(t + 1) * B, :]
                    + jnp.dot(h, whh, preferred_element_type=jnp.float32))
                if l < n_layers - 1:
                    act_ref[t * B:(t + 1) * B, :] = h
            hn_ref[l] = h.astype(hn_ref.dtype)

        # Fused ReLU + FC head on the last layer's final hidden (== out[:, -1]).
        h_relu = jnp.maximum(h, 0.0)
        out_ref[...] = (jnp.dot(h_relu, fc_w_ref[...],
                                preferred_element_type=jnp.float32)
                        + fc_b_ref[...]).astype(out_ref.dtype)

    return kernel


# ----------------------------------------------------------------------------
# Wrapper around pallas_call
# ----------------------------------------------------------------------------
def rnn_net_forward(x, h0, params):
    """Forward pass of RNNNet.

    x  : (B, T, input_dim)   batch_first, like PyTorch
    h0 : (n_layers, B, H)
    returns (out, h_n) with out: (B, output_dim), h_n: (n_layers, B, H)
    """
    B, T, F = x.shape
    n_layers = len(params["rnn"])
    H = params["rnn"][0][1].shape[0]
    O = params["fc_w_t"].shape[1]

    # time-major and flatten (T, B) -> rows, so the per-layer input projection
    # is a single (T*B, F) @ (F, H) matmul inside the kernel.
    x_flat = jnp.transpose(x, (1, 0, 2)).reshape(T * B, F)

    args = [x_flat, h0]
    in_specs = [
        pl.BlockSpec((T * B, F), lambda: (0, 0)),
        pl.BlockSpec((n_layers, B, H), lambda: (0, 0, 0)),
    ]
    for (wih_t, whh_t, b) in params["rnn"]:
        args += [wih_t, whh_t, b]
        in_specs += [
            pl.BlockSpec(wih_t.shape, lambda: (0, 0)),
            pl.BlockSpec(whh_t.shape, lambda: (0, 0)),
            pl.BlockSpec(b.shape, lambda: (0, 0)),
        ]
    args += [params["fc_w_t"], params["fc_b"]]
    in_specs += [
        pl.BlockSpec(params["fc_w_t"].shape, lambda: (0, 0)),
        pl.BlockSpec(params["fc_b"].shape, lambda: (0, 0)),
    ]

    out, h_n = pl.pallas_call(
        make_fused_rnn_kernel(n_layers, T, B),
        out_shape=(jax.ShapeDtypeStruct((B, O), jnp.float32),
                   jax.ShapeDtypeStruct((n_layers, B, H), jnp.float32)),
        in_specs=in_specs,
        out_specs=(pl.BlockSpec((B, O), lambda: (0, 0)),
                   pl.BlockSpec((n_layers, B, H), lambda: (0, 0, 0))),
        scratch_shapes=[pltpu.VMEM((T * B, H), jnp.float32)],
    )(*args)
    return out, h_n


# ----------------------------------------------------------------------------
# Deterministic parameter construction (mimics PyTorch default init ranges).
# Weights are pre-transposed and the two RNN biases are pre-combined on host.
# ----------------------------------------------------------------------------
def make_params(key, input_dim, hidden_dim, output_dim, n_layers):
    params = {"rnn": []}
    k_rnn = 1.0 / jnp.sqrt(hidden_dim)
    for l in range(n_layers):
        in_dim = input_dim if l == 0 else hidden_dim
        key, k1, k2, k3, k4 = jax.random.split(key, 5)
        w_ih = jax.random.uniform(k1, (hidden_dim, in_dim), jnp.float32, -k_rnn, k_rnn)
        w_hh = jax.random.uniform(k2, (hidden_dim, hidden_dim), jnp.float32, -k_rnn, k_rnn)
        b_ih = jax.random.uniform(k3, (hidden_dim,), jnp.float32, -k_rnn, k_rnn)
        b_hh = jax.random.uniform(k4, (hidden_dim,), jnp.float32, -k_rnn, k_rnn)
        params["rnn"].append(
            (w_ih.T, w_hh.T, (b_ih + b_hh).reshape(1, -1)))
    key, k5, k6 = jax.random.split(key, 3)
    k_fc = 1.0 / jnp.sqrt(hidden_dim)
    w_fc = jax.random.uniform(k5, (output_dim, hidden_dim), jnp.float32, -k_fc, k_fc)
    b_fc = jax.random.uniform(k6, (output_dim,), jnp.float32, -k_fc, k_fc)
    params["fc_w_t"] = w_fc.T
    params["fc_b"] = b_fc.reshape(1, -1)
    return params


# ----------------------------------------------------------------------------
# Pure-JAX reference for correctness check
# ----------------------------------------------------------------------------
def reference_forward(x, h0, params):
    B, T, _ = x.shape
    layer_in = x
    h_finals = []
    for (wih_t, whh_t, b), h0_l in zip(params["rnn"], h0):
        h = h0_l
        outs = []
        for t in range(T):
            h = jnp.tanh(layer_in[:, t] @ wih_t + b + h @ whh_t)
            outs.append(h)
        layer_in = jnp.stack(outs, axis=1)
        h_finals.append(h)
    h_n = jnp.stack(h_finals, axis=0)
    last = layer_in[:, -1]
    out = jnp.maximum(last, 0.0) @ params["fc_w_t"] + params["fc_b"]
    return out, h_n


if __name__ == "__main__":
    # Small shapes consistent with the module: 2 input features -> 1 output.
    batch, seq_len = 2, 8
    input_dim, hidden_dim, output_dim, n_layers = 2, 32, 1, 2

    key = jax.random.PRNGKey(0)
    key, kx = jax.random.split(key)
    x = jax.random.normal(kx, (batch, seq_len, input_dim), jnp.float32)
    h0 = jnp.zeros((n_layers, batch, hidden_dim), jnp.float32)  # init_hidden()

    params = make_params(key, input_dim, hidden_dim, output_dim, n_layers)

    out, h_n = jax.jit(rnn_net_forward)(x, h0, params)
    out = jax.block_until_ready(out)
    h_n = jax.block_until_ready(h_n)

    ref_out, ref_h = reference_forward(x, h0, params)
    assert out.shape == (batch, output_dim)
    assert h_n.shape == (n_layers, batch, hidden_dim)
    assert jnp.allclose(out, ref_out, atol=1e-5, rtol=1e-5)
    assert jnp.allclose(h_n, ref_h, atol=1e-5, rtol=1e-5)

    print("KERNEL_OK")
</pallas_src>

<mosaic_0001>
module attributes {stable_mosaic.version = 11 : i64} {
  func.func @kernel(%arg0: memref<16x2xf32, #tpu.memory_space<vmem>>, %arg1: memref<2x2x32xf32, #tpu.memory_space<vmem>>, %arg2: memref<2x32xf32, #tpu.memory_space<vmem>>, %arg3: memref<32x32xf32, #tpu.memory_space<vmem>>, %arg4: memref<1x32xf32, #tpu.memory_space<vmem>>, %arg5: memref<32x32xf32, #tpu.memory_space<vmem>>, %arg6: memref<32x32xf32, #tpu.memory_space<vmem>>, %arg7: memref<1x32xf32, #tpu.memory_space<vmem>>, %arg8: memref<32x1xf32, #tpu.memory_space<vmem>>, %arg9: memref<1x1xf32, #tpu.memory_space<vmem>>, %arg10: memref<2x1xf32, #tpu.memory_space<vmem>>, %arg11: memref<2x2x32xf32, #tpu.memory_space<vmem>>, %arg12: memref<16x32xf32, #tpu.memory_space<vmem>>) attributes {dimension_semantics = [], scalar_prefetch = 0 : i64, scratch_operands = 1 : i64, tpu.core_type = #tpu.core_type<tc>} {
    %c0 = arith.constant 0 : index
    %c0_0 = arith.constant 0 : index
    %0 = vector.load %arg2[%c0, %c0_0] : memref<2x32xf32, #tpu.memory_space<vmem>>, vector<2x32xf32>
    %c0_1 = arith.constant 0 : index
    %c0_2 = arith.constant 0 : index
    %1 = vector.load %arg3[%c0_1, %c0_2] : memref<32x32xf32, #tpu.memory_space<vmem>>, vector<32x32xf32>
    %c0_3 = arith.constant 0 : index
    %c0_4 = arith.constant 0 : index
    %2 = vector.load %arg4[%c0_3, %c0_4] : memref<1x32xf32, #tpu.memory_space<vmem>>, vector<1x32xf32>
    %c0_5 = arith.constant 0 : index
    %c0_6 = arith.constant 0 : index
    %3 = vector.load %arg0[%c0_5, %c0_6] : memref<16x2xf32, #tpu.memory_space<vmem>>, vector<16x2xf32>
    %cst = arith.constant dense<0.000000e+00> : vector<16x32xf32>
    %4 = tpu.matmul %3, %0, %cst {dimension_numbers = #tpu.dot_dimension_numbers<[1], [0], [0], [1], [0, 0, 1, 1], [], []>} : vector<16x2xf32>, vector<2x32xf32>, vector<16x32xf32> -> vector<16x32xf32>
    %5 = vector.broadcast %2 : vector<1x32xf32> to vector<16x32xf32>
    %6 = arith.addf %4, %5 : vector<16x32xf32>
    %c0_7 = arith.constant 0 : index
    %c0_8 = arith.constant 0 : index
    %c0_9 = arith.constant 0 : index
    %7 = vector.load %arg1[%c0_7, %c0_8, %c0_9] : memref<2x2x32xf32, #tpu.memory_space<vmem>>, vector<1x2x32xf32>
    %8 = vector.shape_cast %7 : vector<1x2x32xf32> to vector<2x32xf32>
    %9 = vector.extract_strided_slice %6 {offsets = [0, 0], sizes = [2, 32], strides = [1, 1]} : vector<16x32xf32> to vector<2x32xf32>
    %cst_10 = arith.constant dense<0.000000e+00> : vector<2x32xf32>
    %10 = tpu.matmul %8, %1, %cst_10 {dimension_numbers = #tpu.dot_dimension_numbers<[1], [0], [0], [1], [0, 0, 1, 1], [], []>} : vector<2x32xf32>, vector<32x32xf32>, vector<2x32xf32> -> vector<2x32xf32>
    %11 = arith.addf %9, %10 : vector<2x32xf32>
    %12 = math.tanh %11 : vector<2x32xf32>
    %c0_11 = arith.constant 0 : index
    %c0_12 = arith.constant 0 : index
    %13 = vector.load %arg12[%c0_11, %c0_12] : memref<16x32xf32, #tpu.memory_space<vmem>>, vector<2x32xf32>
    tpu.vector_store %arg12[%c0_11, %c0_12], %12 {strides = array<i32>} : memref<16x32xf32, #tpu.memory_space<vmem>>, vector<2x32xf32>,
    %14 = vector.extract_strided_slice %6 {offsets = [2, 0], sizes = [2, 32], strides = [1, 1]} : vector<16x32xf32> to vector<2x32xf32>
    %cst_13 = arith.constant dense<0.000000e+00> : vector<2x32xf32>
    %15 = tpu.matmul %12, %1, %cst_13 {dimension_numbers = #tpu.dot_dimension_numbers<[1], [0], [0], [1], [0, 0, 1, 1], [], []>} : vector<2x32xf32>, vector<32x32xf32>, vector<2x32xf32> -> vector<2x32xf32>
    %16 = arith.addf %14, %15 : vector<2x32xf32>
    %17 = math.tanh %16 : vector<2x32xf32>
    %c2 = arith.constant 2 : index
    %c0_14 = arith.constant 0 : index
    %18 = vector.load %arg12[%c2, %c0_14] : memref<16x32xf32, #tpu.memory_space<vmem>>, vector<2x32xf32>
    tpu.vector_store %arg12[%c2, %c0_14], %17 {strides = array<i32>} : memref<16x32xf32, #tpu.memory_space<vmem>>, vector<2x32xf32>,
    %19 = vector.extract_strided_slice %6 {offsets = [4, 0], sizes = [2, 32], strides = [1, 1]} : vector<16x32xf32> to vector<2x32xf32>
    %cst_15 = arith.constant dense<0.000000e+00> : vector<2x32xf32>
    %20 = tpu.matmul %17, %1, %cst_15 {dimension_numbers = #tpu.dot_dimension_numbers<[1], [0], [0], [1], [0, 0, 1, 1], [], []>} : vector<2x32xf32>, vector<32x32xf32>, vector<2x32xf32> -> vector<2x32xf32>
    %21 = arith.addf %19, %20 : vector<2x32xf32>
    %22 = math.tanh %21 : vector<2x32xf32>
    %c4 = arith.constant 4 : index
    %c0_16 = arith.constant 0 : index
    %23 = vector.load %arg12[%c4, %c0_16] : memref<16x32xf32, #tpu.memory_space<vmem>>, vector<2x32xf32>
    tpu.vector_store %arg12[%c4, %c0_16], %22 {strides = array<i32>} : memref<16x32xf32, #tpu.memory_space<vmem>>, vector<2x32xf32>,
    %24 = vector.extract_strided_slice %6 {offsets = [6, 0], sizes = [2, 32], strides = [1, 1]} : vector<16x32xf32> to vector<2x32xf32>
    %cst_17 = arith.constant dense<0.000000e+00> : vector<2x32xf32>
    %25 = tpu.matmul %22, %1, %cst_17 {dimension_numbers = #tpu.dot_dimension_numbers<[1], [0], [0], [1], [0, 0, 1, 1], [], []>} : vector<2x32xf32>, vector<32x32xf32>, vector<2x32xf32> -> vector<2x32xf32>
    %26 = arith.addf %24, %25 : vector<2x32xf32>
    %27 = math.tanh %26 : vector<2x32xf32>
    %c6 = arith.constant 6 : index
    %c0_18 = arith.constant 0 : index
    %28 = vector.load %arg12[%c6, %c0_18] : memref<16x32xf32, #tpu.memory_space<vmem>>, vector<2x32xf32>
    tpu.vector_store %arg12[%c6, %c0_18], %27 {strides = array<i32>} : memref<16x32xf32, #tpu.memory_space<vmem>>, vector<2x32xf32>,
    %29 = vector.extract_strided_slice %6 {offsets = [8, 0], sizes = [2, 32], strides = [1, 1]} : vector<16x32xf32> to vector<2x32xf32>
    %cst_19 = arith.constant dense<0.000000e+00> : vector<2x32xf32>
    %30 = tpu.matmul %27, %1, %cst_19 {dimension_numbers = #tpu.dot_dimension_numbers<[1], [0], [0], [1], [0, 0, 1, 1], [], []>} : vector<2x32xf32>, vector<32x32xf32>, vector<2x32xf32> -> vector<2x32xf32>
    %31 = arith.addf %29, %30 : vector<2x32xf32>
    %32 = math.tanh %31 : vector<2x32xf32>
    %c8 = arith.constant 8 : index
    %c0_20 = arith.constant 0 : index
    %33 = vector.load %arg12[%c8, %c0_20] : memref<16x32xf32, #tpu.memory_space<vmem>>, vector<2x32xf32>
    tpu.vector_store %arg12[%c8, %c0_20], %32 {strides = array<i32>} : memref<16x32xf32, #tpu.memory_space<vmem>>, vector<2x32xf32>,
    %34 = vector.extract_strided_slice %6 {offsets = [10, 0], sizes = [2, 32], strides = [1, 1]} : vector<16x32xf32> to vector<2x32xf32>
    %cst_21 = arith.constant dense<0.000000e+00> : vector<2x32xf32>
    %35 = tpu.matmul %32, %1, %cst_21 {dimension_numbers = #tpu.dot_dimension_numbers<[1], [0], [0], [1], [0, 0, 1, 1], [], []>} : vector<2x32xf32>, vector<32x32xf32>, vector<2x32xf32> -> vector<2x32xf32>
    %36 = arith.addf %34, %35 : vector<2x32xf32>
    %37 = math.tanh %36 : vector<2x32xf32>
    %c10 = arith.constant 10 : index
    %c0_22 = arith.constant 0 : index
    %38 = vector.load %arg12[%c10, %c0_22] : memref<16x32xf32, #tpu.memory_space<vmem>>, vector<2x32xf32>
    tpu.vector_store %arg12[%c10, %c0_22], %37 {strides = array<i32>} : memref<16x32xf32, #tpu.memory_space<vmem>>, vector<2x32xf32>,
    %39 = vector.extract_strided_slice %6 {offsets = [12, 0], sizes = [2, 32], strides = [1, 1]} : vector<16x32xf32> to vector<2x32xf32>
    %cst_23 = arith.constant dense<0.000000e+00> : vector<2x32xf32>
    %40 = tpu.matmul %37, %1, %cst_23 {dimension_numbers = #tpu.dot_dimension_numbers<[1], [0], [0], [1], [0, 0, 1, 1], [], []>} : vector<2x32xf32>, vector<32x32xf32>, vector<2x32xf32> -> vector<2x32xf32>
    %41 = arith.addf %39, %40 : vector<2x32xf32>
    %42 = math.tanh %41 : vector<2x32xf32>
    %c12 = arith.constant 12 : index
    %c0_24 = arith.constant 0 : index
    %43 = vector.load %arg12[%c12, %c0_24] : memref<16x32xf32, #tpu.memory_space<vmem>>, vector<2x32xf32>
    tpu.vector_store %arg12[%c12, %c0_24], %42 {strides = array<i32>} : memref<16x32xf32, #tpu.memory_space<vmem>>, vector<2x32xf32>,
    %44 = vector.extract_strided_slice %6 {offsets = [14, 0], sizes = [2, 32], strides = [1, 1]} : vector<16x32xf32> to vector<2x32xf32>
    %cst_25 = arith.constant dense<0.000000e+00> : vector<2x32xf32>
    %45 = tpu.matmul %42, %1, %cst_25 {dimension_numbers = #tpu.dot_dimension_numbers<[1], [0], [0], [1], [0, 0, 1, 1], [], []>} : vector<2x32xf32>, vector<32x32xf32>, vector<2x32xf32> -> vector<2x32xf32>
    %46 = arith.addf %44, %45 : vector<2x32xf32>
    %47 = math.tanh %46 : vector<2x32xf32>
    %c14 = arith.constant 14 : index
    %c0_26 = arith.constant 0 : index
    %48 = vector.load %arg12[%c14, %c0_26] : memref<16x32xf32, #tpu.memory_space<vmem>>, vector<2x32xf32>
    tpu.vector_store %arg12[%c14, %c0_26], %47 {strides = array<i32>} : memref<16x32xf32, #tpu.memory_space<vmem>>, vector<2x32xf32>,
    %c0_27 = arith.constant 0 : index
    %c0_28 = arith.constant 0 : index
    %c0_29 = arith.constant 0 : index
    %49 = vector.load %arg11[%c0_27, %c0_28, %c0_29] : memref<2x2x32xf32, #tpu.memory_space<vmem>>, vector<1x2x32xf32>
    %50 = vector.shape_cast %49 : vector<1x2x32xf32> to vector<2x32xf32>
    %51 = vector.shape_cast %47 : vector<2x32xf32> to vector<1x2x32xf32>
    tpu.vector_store %arg11[%c0_27, %c0_28, %c0_29], %51 {strides = array<i32>} : memref<2x2x32xf32, #tpu.memory_space<vmem>>, vector<1x2x32xf32>,
    %c0_30 = arith.constant 0 : index
    %c0_31 = arith.constant 0 : index
    %52 = vector.load %arg5[%c0_30, %c0_31] : memref<32x32xf32, #tpu.memory_space<vmem>>, vector<32x32xf32>
    %c0_32 = arith.constant 0 : index
    %c0_33 = arith.constant 0 : index
    %53 = vector.load %arg6[%c0_32, %c0_33] : memref<32x32xf32, #tpu.memory_space<vmem>>, vector<32x32xf32>
    %c0_34 = arith.constant 0 : index
    %c0_35 = arith.constant 0 : index
    %54 = vector.load %arg7[%c0_34, %c0_35] : memref<1x32xf32, #tpu.memory_space<vmem>>, vector<1x32xf32>
    %c0_36 = arith.constant 0 : index
    %c0_37 = arith.constant 0 : index
    %55 = vector.load %arg12[%c0_36, %c0_37] : memref<16x32xf32, #tpu.memory_space<vmem>>, vector<16x32xf32>
    %cst_38 = arith.constant dense<0.000000e+00> : vector<16x32xf32>
    %56 = tpu.matmul %55, %52, %cst_38 {dimension_numbers = #tpu.dot_dimension_numbers<[1], [0], [0], [1], [0, 0, 1, 1], [], []>} : vector<16x32xf32>, vector<32x32xf32>, vector<16x32xf32> -> vector<16x32xf32>
    %57 = vector.broadcast %54 : vector<1x32xf32> to vector<16x32xf32>
    %58 = arith.addf %56, %57 : vector<16x32xf32>
    %c1 = arith.constant 1 : index
    %c0_39 = arith.constant 0 : index
    %c0_40 = arith.constant 0 : index
    %59 = vector.load %arg1[%c1, %c0_39, %c0_40] : memref<2x2x32xf32, #tpu.memory_space<vmem>>, vector<1x2x32xf32>
    %60 = vector.shape_cast %59 : vector<1x2x32xf32> to vector<2x32xf32>
    %61 = vector.extract_strided_slice %58 {offsets = [0, 0], sizes = [2, 32], strides = [1, 1]} : vector<16x32xf32> to vector<2x32xf32>
    %cst_41 = arith.constant dense<0.000000e+00> : vector<2x32xf32>
    %62 = tpu.matmul %60, %53, %cst_41 {dimension_numbers = #tpu.dot_dimension_numbers<[1], [0], [0], [1], [0, 0, 1, 1], [], []>} : vector<2x32xf32>, vector<32x32xf32>, vector<2x32xf32> -> vector<2x32xf32>
    %63 = arith.addf %61, %62 : vector<2x32xf32>
    %64 = math.tanh %63 : vector<2x32xf32>
    %65 = vector.extract_strided_slice %58 {offsets = [2, 0], sizes = [2, 32], strides = [1, 1]} : vector<16x32xf32> to vector<2x32xf32>
    %cst_42 = arith.constant dense<0.000000e+00> : vector<2x32xf32>
    %66 = tpu.matmul %64, %53, %cst_42 {dimension_numbers = #tpu.dot_dimension_numbers<[1], [0], [0], [1], [0, 0, 1, 1], [], []>} : vector<2x32xf32>, vector<32x32xf32>, vector<2x32xf32> -> vector<2x32xf32>
    %67 = arith.addf %65, %66 : vector<2x32xf32>
    %68 = math.tanh %67 : vector<2x32xf32>
    %69 = vector.extract_strided_slice %58 {offsets = [4, 0], sizes = [2, 32], strides = [1, 1]} : vector<16x32xf32> to vector<2x32xf32>
    %cst_43 = arith.constant dense<0.000000e+00> : vector<2x32xf32>
    %70 = tpu.matmul %68, %53, %cst_43 {dimension_numbers = #tpu.dot_dimension_numbers<[1], [0], [0], [1], [0, 0, 1, 1], [], []>} : vector<2x32xf32>, vector<32x32xf32>, vector<2x32xf32> -> vector<2x32xf32>
    %71 = arith.addf %69, %70 : vector<2x32xf32>
    %72 = math.tanh %71 : vector<2x32xf32>
    %73 = vector.extract_strided_slice %58 {offsets = [6, 0], sizes = [2, 32], strides = [1, 1]} : vector<16x32xf32> to vector<2x32xf32>
    %cst_44 = arith.constant dense<0.000000e+00> : vector<2x32xf32>
    %74 = tpu.matmul %72, %53, %cst_44 {dimension_numbers = #tpu.dot_dimension_numbers<[1], [0], [0], [1], [0, 0, 1, 1], [], []>} : vector<2x32xf32>, vector<32x32xf32>, vector<2x32xf32> -> vector<2x32xf32>
    %75 = arith.addf %73, %74 : vector<2x32xf32>
    %76 = math.tanh %75 : vector<2x32xf32>
    %77 = vector.extract_strided_slice %58 {offsets = [8, 0], sizes = [2, 32], strides = [1, 1]} : vector<16x32xf32> to vector<2x32xf32>
    %cst_45 = arith.constant dense<0.000000e+00> : vector<2x32xf32>
    %78 = tpu.matmul %76, %53, %cst_45 {dimension_numbers = #tpu.dot_dimension_numbers<[1], [0], [0], [1], [0, 0, 1, 1], [], []>} : vector<2x32xf32>, vector<32x32xf32>, vector<2x32xf32> -> vector<2x32xf32>
    %79 = arith.addf %77, %78 : vector<2x32xf32>
    %80 = math.tanh %79 : vector<2x32xf32>
    %81 = vector.extract_strided_slice %58 {offsets = [10, 0], sizes = [2, 32], strides = [1, 1]} : vector<16x32xf32> to vector<2x32xf32>
    %cst_46 = arith.constant dense<0.000000e+00> : vector<2x32xf32>
    %82 = tpu.matmul %80, %53, %cst_46 {dimension_numbers = #tpu.dot_dimension_numbers<[1], [0], [0], [1], [0, 0, 1, 1], [], []>} : vector<2x32xf32>, vector<32x32xf32>, vector<2x32xf32> -> vector<2x32xf32>
    %83 = arith.addf %81, %82 : vector<2x32xf32>
    %84 = math.tanh %83 : vector<2x32xf32>
    %85 = vector.extract_strided_slice %58 {offsets = [12, 0], sizes = [2, 32], strides = [1, 1]} : vector<16x32xf32> to vector<2x32xf32>
    %cst_47 = arith.constant dense<0.000000e+00> : vector<2x32xf32>
    %86 = tpu.matmul %84, %53, %cst_47 {dimension_numbers = #tpu.dot_dimension_numbers<[1], [0], [0], [1], [0, 0, 1, 1], [], []>} : vector<2x32xf32>, vector<32x32xf32>, vector<2x32xf32> -> vector<2x32xf32>
    %87 = arith.addf %85, %86 : vector<2x32xf32>
    %88 = math.tanh %87 : vector<2x32xf32>
    %89 = vector.extract_strided_slice %58 {offsets = [14, 0], sizes = [2, 32], strides = [1, 1]} : vector<16x32xf32> to vector<2x32xf32>
    %cst_48 = arith.constant dense<0.000000e+00> : vector<2x32xf32>
    %90 = tpu.matmul %88, %53, %cst_48 {dimension_numbers = #tpu.dot_dimension_numbers<[1], [0], [0], [1], [0, 0, 1, 1], [], []>} : vector<2x32xf32>, vector<32x32xf32>, vector<2x32xf32> -> vector<2x32xf32>
    %91 = arith.addf %89, %90 : vector<2x32xf32>
    %92 = math.tanh %91 : vector<2x32xf32>
    %c1_49 = arith.constant 1 : index
    %c0_50 = arith.constant 0 : index
    %c0_51 = arith.constant 0 : index
    %93 = vector.load %arg11[%c1_49, %c0_50, %c0_51] : memref<2x2x32xf32, #tpu.memory_space<vmem>>, vector<1x2x32xf32>
    %94 = vector.shape_cast %93 : vector<1x2x32xf32> to vector<2x32xf32>
    %95 = vector.shape_cast %92 : vector<2x32xf32> to vector<1x2x32xf32>
    tpu.vector_store %arg11[%c1_49, %c0_50, %c0_51], %95 {strides = array<i32>} : memref<2x2x32xf32, #tpu.memory_space<vmem>>, vector<1x2x32xf32>,
    %cst_52 = arith.constant 0.000000e+00 : f32
    %96 = vector.broadcast %cst_52 : f32 to vector<2x32xf32>
    %97 = arith.maximumf %92, %96 : vector<2x32xf32>
    %c0_53 = arith.constant 0 : index
    %c0_54 = arith.constant 0 : index
    %98 = vector.load %arg8[%c0_53, %c0_54] : memref<32x1xf32, #tpu.memory_space<vmem>>, vector<32x1xf32>
    %cst_55 = arith.constant dense<0.000000e+00> : vector<2x1xf32>
    %99 = tpu.matmul %97, %98, %cst_55 {dimension_numbers = #tpu.dot_dimension_numbers<[1], [0], [0], [1], [0, 0, 1, 1], [], []>} : vector<2x32xf32>, vector<32x1xf32>, vector<2x1xf32> -> vector<2x1xf32>
    %c0_56 = arith.constant 0 : index
    %c0_57 = arith.constant 0 : index
    %100 = vector.load %arg9[%c0_56, %c0_57] : memref<1x1xf32, #tpu.memory_space<vmem>>, vector<1x1xf32>
    %101 = vector.broadcast %100 : vector<1x1xf32> to vector<2x1xf32>
    %102 = arith.addf %99, %101 : vector<2x1xf32>
    %c0_58 = arith.constant 0 : index
    %c0_59 = arith.constant 0 : index
    %103 = vector.load %arg10[%c0_58, %c0_59] : memref<2x1xf32, #tpu.memory_space<vmem>>, vector<2x1xf32>
    tpu.vector_store %arg10[%c0_58, %c0_59], %102 {strides = array<i32>} : memref<2x1xf32, #tpu.memory_space<vmem>>, vector<2x1xf32>,
    return
  }
}

</mosaic_0001>

<llo_original>
// kernel: rnn_net_forward.1
$region0: #{rnn_net_forward.1}
  #allocation0 [shape = 'u32[]', space=smem, size = 0x4, offset = 0x4, fixed_abs, tag = 'smem constant byte address 0x4 - core index']
  #allocation1 [shape = 'u32[72,128]{1,0:T(1,128)}', space=vmem, size = 0x9000, scoped, tag = 'internal scratch']
  #allocation2 [shape = 'f32[16,32]{1,0:T(8,128)}', space=vmem, size = 0x2000, scoped, tag = 'scratch operand']
  #allocation3 [shape = 'f32[1,1]{1,0:T(1,128)S(1)}', space=vmem, size = 0x200, scoped, tag = 'scoped memory for rnn_net_forward.1']
  %s0 = inlined_call_operand.vmem [shape: f32[16,2], index: 0, kind: input, shape index: {}]
  %s1 = inlined_call_operand.vmem [shape: f32[2,2,32], index: 1, kind: input, shape index: {}]
  %s2 = inlined_call_operand.vmem [shape: f32[2,32], index: 2, kind: input, shape index: {}]
  %s3 = inlined_call_operand.vmem [shape: f32[32,32], index: 3, kind: input, shape index: {}]
  %s4 = inlined_call_operand.vmem [shape: f32[1,32], index: 4, kind: input, shape index: {}]
  %s5 = inlined_call_operand.hbm [shape: f32[32,32], index: 5, kind: input, shape index: {}]
  %s6 = inlined_call_operand.hbm [shape: f32[32,32], index: 6, kind: input, shape index: {}]
  %s7 = inlined_call_operand.vmem [shape: f32[1,32], index: 7, kind: input, shape index: {}]
  %s8 = inlined_call_operand.vmem [shape: f32[32,1], index: 8, kind: input, shape index: {}]
  %s9 = inlined_call_operand.<no memory space> [shape: f32[1,1], index: 9, kind: input, shape index: {}]
  %s10 = inlined_call_operand.vmem [shape: f32[2,1], index: 10, kind: output, shape index: {0}]
  %s11 = inlined_call_operand.hbm [shape: f32[2,2,32], index: 11, kind: output, shape index: {1}]
  %12 = xla_tuple %s10, %s11
  %s13 = sld [smem:[#allocation0]]
  $region66: #{rnn_net_forward.1} parent=0
    _
  %s15 = ssub.s32 1, %s13
  %s16 = scalar_select 0, %s15, %s13
  %v17 = vstv %s9
  %18 = vst [vmem:[#allocation3] sm:$0x1] %v17
  $region1: #{rnn_net_forward.1} parent=0
    #allocation4 [shape = 'u8[16384]{0}', space=vmem, size = 0x4000, scoped, tag = 'input window, operand 5, single buffered']
    #allocation5 [shape = 's32[1]{0}', space=sflag, size = 0x4, scoped, tag = 'scoped memory for rnn_net_forward.1']
    #allocation6 [shape = 's32[1]{0}', space=sflag, size = 0x4, scoped, tag = 'scoped memory for rnn_net_forward.1']
    #allocation7 [shape = 'u8[16384]{0}', space=vmem, size = 0x4000, scoped, tag = 'input window, operand 6, single buffered']
    #allocation8 [shape = 's32[1]{0}', space=sflag, size = 0x4, scoped, tag = 'scoped memory for rnn_net_forward.1']
    #allocation9 [shape = 'u8[2048]{0}', space=vmem, size = 0x800, scoped, tag = 'output window, operand 1, single buffered']
    %19 = vsyncpa [#allocation5], 0
    %20 = vsyncpa [#allocation8], 0
    %21 = vsyncpa [#allocation6], 0
    // Predicated region
    $region2: #{rnn_net_forward.1} parent=1 // pred_check
      _
    $region3: #{rnn_net_forward.1} parent=1 // pred_check_branch
      %23 = sbr.rel (0) target = $region5
    $region4: #{rnn_net_forward.1} parent=1 // pred_region
      _
    $region5: #{rnn_net_forward.1} parent=1 // pred_fallthru
      _
    // Predicated region
    $region6: #{rnn_net_forward.1} parent=1 // pred_check
      _
    $region7: #{rnn_net_forward.1} parent=1 // pred_check_branch
      %25 = sbr.rel (0) target = $region9
    $region8: #{rnn_net_forward.1} parent=1 // pred_region
      _
    $region9: #{rnn_net_forward.1} parent=1 // pred_fallthru
      _
    // Predicated region
    $region10: #{rnn_net_forward.1} parent=1 // pred_check
      _
    $region11: #{rnn_net_forward.1} parent=1 // pred_check_branch
      %27 = sbr.rel (0) target = $region13
    $region12: #{rnn_net_forward.1} parent=1 // pred_region
      _
    $region13: #{rnn_net_forward.1} parent=1 // pred_fallthru
      _
    // Predicated region
    $region14: #{rnn_net_forward.1} parent=1 // pred_check
      _
    $region15: #{rnn_net_forward.1} parent=1 // pred_check_branch
      %29 = sbr.rel (0) target = $region17
    $region16: #{rnn_net_forward.1} parent=1 // pred_region
      _
    $region17: #{rnn_net_forward.1} parent=1 // pred_fallthru
      _
    // Predicated region
    $region18: #{rnn_net_forward.1} parent=1 // pred_check
      _
    $region19: #{rnn_net_forward.1} parent=1 // pred_check_branch
      %31 = sbr.rel (0) target = $region21
    $region20: #{rnn_net_forward.1} parent=1 // pred_region
      _
    $region21: #{rnn_net_forward.1} parent=1 // pred_fallthru
      _
    // Predicated region
    $region22: #{rnn_net_forward.1} parent=1 // pred_check
      _
    $region23: #{rnn_net_forward.1} parent=1 // pred_check_branch
      %33 = sbr.rel (0) target = $region25
    $region24: #{rnn_net_forward.1} parent=1 // pred_region
      %35 = vsyncadd [#allocation5], 0
      %s36 = sshll.u32 %s5, 4
      %s37 = int_to_ptr.hbm [resolvable:$true] %s36
      %s38 = sshll.u32 [#allocation4], 4
      %s39 = int_to_ptr.vmem [resolvable:$true] %s38
      %44 = dma.hbm_to_vmem [thread:$0]  %s37, 512, %s39, [#allocation5], 128, 128, 8
    $region25: #{rnn_net_forward.1} parent=1 // pred_fallthru
      _
    // Predicated region
    $region26: #{rnn_net_forward.1} parent=1 // pred_check
      _
    $region27: #{rnn_net_forward.1} parent=1 // pred_check_branch
      %46 = sbr.rel (0) target = $region29
    $region28: #{rnn_net_forward.1} parent=1 // pred_region
      %48 = vsyncadd [#allocation8], 0
      %s49 = sshll.u32 %s6, 4
      %s50 = int_to_ptr.hbm [resolvable:$true] %s49
      %s51 = sshll.u32 [#allocation7], 4
      %s52 = int_to_ptr.vmem [resolvable:$true] %s51
      %57 = dma.hbm_to_vmem [thread:$0]  %s50, 512, %s52, [#allocation8], 128, 128, 8
    $region29: #{rnn_net_forward.1} parent=1 // pred_fallthru
      _
    // Predicated region
    $region30: #{rnn_net_forward.1} parent=1 // pred_check
      _
    $region31: #{rnn_net_forward.1} parent=1 // pred_check_branch
      %59 = sbr.rel (0) target = $region33
    $region32: #{rnn_net_forward.1} parent=1 // pred_region
      _
    $region33: #{rnn_net_forward.1} parent=1 // pred_fallthru
      _
    // Predicated region
    $region34: #{rnn_net_forward.1} parent=1 // pred_check
      _
    $region35: #{rnn_net_forward.1} parent=1 // pred_check_branch
      %61 = sbr.rel (0) target = $region37
    $region36: #{rnn_net_forward.1} parent=1 // pred_region
      _
    $region37: #{rnn_net_forward.1} parent=1 // pred_fallthru
      _
    // Predicated region
    $region38: #{rnn_net_forward.1} parent=1 // pred_check
      _
    $region39: #{rnn_net_forward.1} parent=1 // pred_check_branch
      %63 = sbr.rel (0) target = $region41
    $region40: #{rnn_net_forward.1} parent=1 // pred_region
      _
    $region41: #{rnn_net_forward.1} parent=1 // pred_fallthru
      _
    // Predicated region
    $region42: #{rnn_net_forward.1} parent=1 // pred_check
      _
    $region43: #{rnn_net_forward.1} parent=1 // pred_check_branch
      %65 = sbr.rel (0) target = $region45
    $region44: #{rnn_net_forward.1} parent=1 // pred_region
      %67 = dma.done [#allocation5], 512
    $region45: #{rnn_net_forward.1} parent=1 // pred_fallthru
      _
    // Predicated region
    $region46: #{rnn_net_forward.1} parent=1 // pred_check
      _
    $region47: #{rnn_net_forward.1} parent=1 // pred_check_branch
      %69 = sbr.rel (0) target = $region49
    $region48: #{rnn_net_forward.1} parent=1 // pred_region
      %71 = dma.done [#allocation8], 512
    $region49: #{rnn_net_forward.1} parent=1 // pred_fallthru
      _
    %v72 = vld [vmem:[%s2] sm:$0x3]
    %v73 = vld [vmem:[%s3] sm:$0xff]
    %v74 = vld [vmem:[%s3 + $0x8] sm:$0xff]
    %v75 = vld [vmem:[%s3 + $0x10] sm:$0xff]
    %v76 = vld [vmem:[%s3 + $0x18] sm:$0xff]
    %v77 = vld [vmem:[%s4] sm:$0x1]
    %v78 = vld [vmem:[%s0] sm:$0xff]
    %v79 = vld [vmem:[%s0 + $0x8] sm:$0xff]
    %v81 = vperm.slane %v77, 0
    %vm83 = vcmask 15360
    %v85 = vsel %vm83, %v78, 0
    %v88 = vsel %vm83, %v79, 0
    %vm90 = vcmask 1041408
    %v92 = vsel %vm90, %v72, 0
    %94 = vmatpush.msra.mxu0 0.0
    %95 = vmatpush.msra.mxu0 0.0
    %96 = vmatpush.msra.mxu0 0.0
    %97 = vmatpush.msra.mxu0 0.0
    %98 = vmatpush.msra.mxu0 0.0
    %99 = vmatpush.msra.mxu0 0.0
    %100 = vmatpush.msra.mxu0 0.0
    %101 = vmatpush.msra.mxu0 0.0
    %102 = vmatpush.msra.mxu0 0.0
    %103 = vmatpush.msra.mxu0 0.0
    %104 = vmatpush.msra.mxu0 0.0
    %105 = vmatpush.msra.mxu0 0.0
    %106 = vmatpush.msra.mxu0 0.0
    %107 = vmatpush.msra.mxu0 0.0
    %108 = vmatpush.msra.mxu0 0.0
    %109 = vmatpush.msra.mxu0 %v92
    %110 = vmatmul.f32.gmra.mxu0 %v85
    %v111 = vpop.f32.mrf.mxu0
    %v112 = vadd.f32 %v81, %v111
    %113 = vmatmul.f32.gmra.mxu0 %v88
    %v114 = vpop.f32.mrf.mxu0
    %v115 = vadd.f32 %v81, %v114
    %116 = vdwg.mxu0
    %v117 = vld [vmem:[%s1] sm:$0x3]
    %vm118 = vcmask 261120
    %v120 = vsel %vm118, %v117, 0
    %122 = vmatpush.msra.mxu0 0.0
    %123 = vmatpush.msra.mxu0 0.0
    %124 = vmatpush.msra.mxu0 0.0
    %125 = vmatpush.msra.mxu0 0.0
    %126 = vmatpush.msra.mxu0 0.0
    %127 = vmatpush.msra.mxu0 0.0
    %128 = vmatpush.msra.mxu0 0.0
    %129 = vmatpush.msra.mxu0 0.0
    %130 = vmatpush.msra.mxu0 0.0
    %131 = vmatpush.msra.mxu0 0.0
    %132 = vmatpush.msra.mxu0 0.0
    %133 = vmatpush.msra.mxu0 0.0
    %134 = vmatpush.msra.mxu0 %v76
    %135 = vmatpush.msra.mxu0 %v75
    %136 = vmatpush.msra.mxu0 %v74
    %137 = vmatpush.msra.mxu0 %v73
    %138 = vmatmul.f32.gmra.mxu0 %v120
    %v139 = vpop.f32.mrf.mxu0
    %v140 = vadd.f32 0.0, %v139
    %141 = vdwg.mxu0
    %v142 = vadd.f32 %v112, %v140
    %v143 = vtanh.pop %v142
    %vm144 = vcmask 254976
    %145 = vst.msk [vmem:[#allocation2] sm:$0x3] %vm144, %v143
    %v147 = vsel %vm118, %v143, 0
    %149 = vmatpush.msra.mxu0 0.0
    %150 = vmatpush.msra.mxu0 0.0
    %151 = vmatpush.msra.mxu0 0.0
    %152 = vmatpush.msra.mxu0 0.0
    %153 = vmatpush.msra.mxu0 0.0
    %154 = vmatpush.msra.mxu0 0.0
    %155 = vmatpush.msra.mxu0 0.0
    %156 = vmatpush.msra.mxu0 0.0
    %157 = vmatpush.msra.mxu0 0.0
    %158 = vmatpush.msra.mxu0 0.0
    %159 = vmatpush.msra.mxu0 0.0
    %160 = vmatpush.msra.mxu0 0.0
    %161 = vmatpush.msra.mxu0 %v76
    %162 = vmatpush.msra.mxu0 %v75
    %163 = vmatpush.msra.mxu0 %v74
    %164 = vmatpush.msra.mxu0 %v73
    %165 = vmatmul.f32.gmra.mxu0 %v147
    %v166 = vpop.f32.mrf.mxu0
    %v167 = vadd.f32 0.0, %v166
    %168 = vdwg.mxu0
    %v170 = vrot.slane %v167, 6
    %v172 = vadd.f32 %v112, %v170
    %v173 = vtanh.pop %v172
    %vm174 = vcmask 257026
    %175 = vst.msk [vmem:[#allocation2] sm:$0xc] %vm174, %v173
    %v177 = vrot.slane %v173, 2
    %v178 = vsel %vm118, %v177, 0
    %180 = vmatpush.msra.mxu0 0.0
    %181 = vmatpush.msra.mxu0 0.0
    %182 = vmatpush.msra.mxu0 0.0
    %183 = vmatpush.msra.mxu0 0.0
    %184 = vmatpush.msra.mxu0 0.0
    %185 = vmatpush.msra.mxu0 0.0
    %186 = vmatpush.msra.mxu0 0.0
    %187 = vmatpush.msra.mxu0 0.0
    %188 = vmatpush.msra.mxu0 0.0
    %189 = vmatpush.msra.mxu0 0.0
    %190 = vmatpush.msra.mxu0 0.0
    %191 = vmatpush.msra.mxu0 0.0
    %192 = vmatpush.msra.mxu0 %v76
    %193 = vmatpush.msra.mxu0 %v75
    %194 = vmatpush.msra.mxu0 %v74
    %195 = vmatpush.msra.mxu0 %v73
    %196 = vmatmul.f32.gmra.mxu0 %v178
    %v197 = vpop.f32.mrf.mxu0
    %v198 = vadd.f32 0.0, %v197
    %199 = vdwg.mxu0
    %v201 = vrot.slane %v198, 4
    %v203 = vadd.f32 %v112, %v201
    %v204 = vtanh.pop %v203
    %vm205 = vcmask 259076
    %206 = vst.msk [vmem:[#allocation2] sm:$0x30] %vm205, %v204
    %v208 = vrot.slane %v204, 4
    %v209 = vsel %vm118, %v208, 0
    %211 = vmatpush.msra.mxu0 0.0
    %212 = vmatpush.msra.mxu0 0.0
    %213 = vmatpush.msra.mxu0 0.0
    %214 = vmatpush.msra.mxu0 0.0
    %215 = vmatpush.msra.mxu0 0.0
    %216 = vmatpush.msra.mxu0 0.0
    %217 = vmatpush.msra.mxu0 0.0
    %218 = vmatpush.msra.mxu0 0.0
    %219 = vmatpush.msra.mxu0 0.0
    %220 = vmatpush.msra.mxu0 0.0
    %221 = vmatpush.msra.mxu0 0.0
    %222 = vmatpush.msra.mxu0 0.0
    %223 = vmatpush.msra.mxu0 %v76
    %224 = vmatpush.msra.mxu0 %v75
    %225 = vmatpush.msra.mxu0 %v74
    %226 = vmatpush.msra.mxu0 %v73
    %227 = vmatmul.f32.gmra.mxu0 %v209
    %v228 = vpop.f32.mrf.mxu0
    %v229 = vadd.f32 0.0, %v228
    %230 = vdwg.mxu0
    %v232 = vrot.slane %v229, 2
    %v234 = vadd.f32 %v112, %v232
    %v235 = vtanh.pop %v234
    %vm236 = vcmask 261126
    %237 = vst.msk [vmem:[#allocation2] sm:$0xc0] %vm236, %v235
    %v239 = vrot.slane %v235, 6
    %v240 = vsel %vm118, %v239, 0
    %242 = vmatpush.msra.mxu0 0.0
    %243 = vmatpush.msra.mxu0 0.0
    %244 = vmatpush.msra.mxu0 0.0
    %245 = vmatpush.msra.mxu0 0.0
    %246 = vmatpush.msra.mxu0 0.0
    %247 = vmatpush.msra.mxu0 0.0
    %248 = vmatpush.msra.mxu0 0.0
    %249 = vmatpush.msra.mxu0 0.0
    %250 = vmatpush.msra.mxu0 0.0
    %251 = vmatpush.msra.mxu0 0.0
    %252 = vmatpush.msra.mxu0 0.0
    %253 = vmatpush.msra.mxu0 0.0
    %254 = vmatpush.msra.mxu0 %v76
    %255 = vmatpush.msra.mxu0 %v75
    %256 = vmatpush.msra.mxu0 %v74
    %257 = vmatpush.msra.mxu0 %v73
    %258 = vmatmul.f32.gmra.mxu0 %v240
    %v259 = vpop.f32.mrf.mxu0
    %v260 = vadd.f32 0.0, %v259
    %261 = vdwg.mxu0
    %v262 = vadd.f32 %v115, %v260
    %v263 = vtanh.pop %v262
    %264 = vst.msk [vmem:[#allocation2 + $0x8] sm:$0x3] %vm144, %v263
    %v266 = vsel %vm118, %v263, 0
    %268 = vmatpush.msra.mxu0 0.0
    %269 = vmatpush.msra.mxu0 0.0
    %270 = vmatpush.msra.mxu0 0.0
    %271 = vmatpush.msra.mxu0 0.0
    %272 = vmatpush.msra.mxu0 0.0
    %273 = vmatpush.msra.mxu0 0.0
    %274 = vmatpush.msra.mxu0 0.0
    %275 = vmatpush.msra.mxu0 0.0
    %276 = vmatpush.msra.mxu0 0.0
    %277 = vmatpush.msra.mxu0 0.0
    %278 = vmatpush.msra.mxu0 0.0
    %279 = vmatpush.msra.mxu0 0.0
    %280 = vmatpush.msra.mxu0 %v76
    %281 = vmatpush.msra.mxu0 %v75
    %282 = vmatpush.msra.mxu0 %v74
    %283 = vmatpush.msra.mxu0 %v73
    %284 = vmatmul.f32.gmra.mxu0 %v266
    %v285 = vpop.f32.mrf.mxu0
    %v286 = vadd.f32 0.0, %v285
    %287 = vdwg.mxu0
    %v289 = vrot.slane %v286, 6
    %v291 = vadd.f32 %v115, %v289
    %v292 = vtanh.pop %v291
    %293 = vst.msk [vmem:[#allocation2 + $0x8] sm:$0xc] %vm174, %v292
    %v295 = vrot.slane %v292, 2
    %v296 = vsel %vm118, %v295, 0
    %298 = vmatpush.msra.mxu0 0.0
    %299 = vmatpush.msra.mxu0 0.0
    %300 = vmatpush.msra.mxu0 0.0
    %301 = vmatpush.msra.mxu0 0.0
    %302 = vmatpush.msra.mxu0 0.0
    %303 = vmatpush.msra.mxu0 0.0
    %304 = vmatpush.msra.mxu0 0.0
    %305 = vmatpush.msra.mxu0 0.0
    %306 = vmatpush.msra.mxu0 0.0
    %307 = vmatpush.msra.mxu0 0.0
    %308 = vmatpush.msra.mxu0 0.0
    %309 = vmatpush.msra.mxu0 0.0
    %310 = vmatpush.msra.mxu0 %v76
    %311 = vmatpush.msra.mxu0 %v75
    %312 = vmatpush.msra.mxu0 %v74
    %313 = vmatpush.msra.mxu0 %v73
    %314 = vmatmul.f32.gmra.mxu0 %v296
    %v315 = vpop.f32.mrf.mxu0
    %v316 = vadd.f32 0.0, %v315
    %317 = vdwg.mxu0
    %v319 = vrot.slane %v316, 4
    %v321 = vadd.f32 %v115, %v319
    %v322 = vtanh.pop %v321
    %323 = vst.msk [vmem:[#allocation2 + $0x8] sm:$0x30] %vm205, %v322
    %v325 = vrot.slane %v322, 4
    %v326 = vsel %vm118, %v325, 0
    %328 = vmatpush.msra.mxu0 0.0
    %329 = vmatpush.msra.mxu0 0.0
    %330 = vmatpush.msra.mxu0 0.0
    %331 = vmatpush.msra.mxu0 0.0
    %332 = vmatpush.msra.mxu0 0.0
    %333 = vmatpush.msra.mxu0 0.0
    %334 = vmatpush.msra.mxu0 0.0
    %335 = vmatpush.msra.mxu0 0.0
    %336 = vmatpush.msra.mxu0 0.0
    %337 = vmatpush.msra.mxu0 0.0
    %338 = vmatpush.msra.mxu0 0.0
    %339 = vmatpush.msra.mxu0 0.0
    %340 = vmatpush.msra.mxu0 %v76
    %341 = vmatpush.msra.mxu0 %v75
    %342 = vmatpush.msra.mxu0 %v74
    %343 = vmatpush.msra.mxu0 %v73
    %344 = vmatmul.f32.gmra.mxu0 %v326
    %v345 = vpop.f32.mrf.mxu0
    %v346 = vadd.f32 0.0, %v345
    %347 = vdwg.mxu0
    %v349 = vrot.slane %v346, 2
    %v351 = vadd.f32 %v115, %v349
    %v352 = vtanh.pop %v351
    %353 = vst.msk [vmem:[#allocation2 + $0x8] sm:$0xc0] %vm236, %v352
    %354 = vst.msk [vmem:[#allocation9 - $0x6] sm:$0xc0] %vm236, %v352
    %v355 = vld [vmem:[#allocation4] sm:$0xff]
    %v356 = vld [vmem:[#allocation4 + $0x8] sm:$0xff]
    %v357 = vld [vmem:[#allocation4 + $0x10] sm:$0xff]
    %v358 = vld [vmem:[#allocation4 + $0x18] sm:$0xff]
    %v359 = vld [vmem:[#allocation7] sm:$0xff]
    %v360 = vld [vmem:[#allocation7 + $0x8] sm:$0xff]
    %v361 = vld [vmem:[#allocation7 + $0x10] sm:$0xff]
    %v362 = vld [vmem:[#allocation7 + $0x18] sm:$0xff]
    %v363 = vld [vmem:[%s7] sm:$0x1]
    %v364 = vld [vmem:[#allocation2] sm:$0xff]
    %v365 = vld [vmem:[#allocation2 + $0x8] sm:$0xff]
    %v367 = vperm.slane %v363, 0
    %v370 = vsel %vm118, %v364, 0
    %v373 = vsel %vm118, %v365, 0
    %375 = vmatpush.msra.mxu0 0.0
    %376 = vmatpush.msra.mxu0 0.0
    %377 = vmatpush.msra.mxu0 0.0
    %378 = vmatpush.msra.mxu0 0.0
    %379 = vmatpush.msra.mxu0 0.0
    %380 = vmatpush.msra.mxu0 0.0
    %381 = vmatpush.msra.mxu0 0.0
    %382 = vmatpush.msra.mxu0 0.0
    %383 = vmatpush.msra.mxu0 0.0
    %384 = vmatpush.msra.mxu0 0.0
    %385 = vmatpush.msra.mxu0 0.0
    %386 = vmatpush.msra.mxu0 0.0
    %387 = vmatpush.msra.mxu0 %v358
    %388 = vmatpush.msra.mxu0 %v357
    %389 = vmatpush.msra.mxu0 %v356
    %390 = vmatpush.msra.mxu0 %v355
    %391 = vmatmul.f32.gmra.mxu0 %v370
    %v392 = vpop.f32.mrf.mxu0
    %v393 = vadd.f32 %v367, %v392
    %394 = vmatmul.f32.gmra.mxu0 %v373
    %v395 = vpop.f32.mrf.mxu0
    %v396 = vadd.f32 %v367, %v395
    %397 = vdwg.mxu0
    %s398 = scalar_lea.vmem %s1, 2
    %v399 = vld [vmem:[%s398] sm:$0x3]
    %v401 = vsel %vm118, %v399, 0
    %403 = vmatpush.msra.mxu0 0.0
    %404 = vmatpush.msra.mxu0 0.0
    %405 = vmatpush.msra.mxu0 0.0
    %406 = vmatpush.msra.mxu0 0.0
    %407 = vmatpush.msra.mxu0 0.0
    %408 = vmatpush.msra.mxu0 0.0
    %409 = vmatpush.msra.mxu0 0.0
    %410 = vmatpush.msra.mxu0 0.0
    %411 = vmatpush.msra.mxu0 0.0
    %412 = vmatpush.msra.mxu0 0.0
    %413 = vmatpush.msra.mxu0 0.0
    %414 = vmatpush.msra.mxu0 0.0
    %415 = vmatpush.msra.mxu0 %v362
    %416 = vmatpush.msra.mxu0 %v361
    %417 = vmatpush.msra.mxu0 %v360
    %418 = vmatpush.msra.mxu0 %v359
    %419 = vmatmul.f32.gmra.mxu0 %v401
    %v420 = vpop.f32.mrf.mxu0
    %v421 = vadd.f32 0.0, %v420
    %422 = vdwg.mxu0
    %v423 = vadd.f32 %v393, %v421
    %v424 = vtanh.pop %v423
    %v426 = vsel %vm118, %v424, 0
    %428 = vmatpush.msra.mxu0 0.0
    %429 = vmatpush.msra.mxu0 0.0
    %430 = vmatpush.msra.mxu0 0.0
    %431 = vmatpush.msra.mxu0 0.0
    %432 = vmatpush.msra.mxu0 0.0
    %433 = vmatpush.msra.mxu0 0.0
    %434 = vmatpush.msra.mxu0 0.0
    %435 = vmatpush.msra.mxu0 0.0
    %436 = vmatpush.msra.mxu0 0.0
    %437 = vmatpush.msra.mxu0 0.0
    %438 = vmatpush.msra.mxu0 0.0
    %439 = vmatpush.msra.mxu0 0.0
    %440 = vmatpush.msra.mxu0 %v362
    %441 = vmatpush.msra.mxu0 %v361
    %442 = vmatpush.msra.mxu0 %v360
    %443 = vmatpush.msra.mxu0 %v359
    %444 = vmatmul.f32.gmra.mxu0 %v426
    %v445 = vpop.f32.mrf.mxu0
    %v446 = vadd.f32 0.0, %v445
    %447 = vdwg.mxu0
    %v449 = vrot.slane %v446, 6
    %v451 = vadd.f32 %v393, %v449
    %v452 = vtanh.pop %v451
    %v454 = vrot.slane %v452, 2
    %v455 = vsel %vm118, %v454, 0
    %457 = vmatpush.msra.mxu0 0.0
    %458 = vmatpush.msra.mxu0 0.0
    %459 = vmatpush.msra.mxu0 0.0
    %460 = vmatpush.msra.mxu0 0.0
    %461 = vmatpush.msra.mxu0 0.0
    %462 = vmatpush.msra.mxu0 0.0
    %463 = vmatpush.msra.mxu0 0.0
    %464 = vmatpush.msra.mxu0 0.0
    %465 = vmatpush.msra.mxu0 0.0
    %466 = vmatpush.msra.mxu0 0.0
    %467 = vmatpush.msra.mxu0 0.0
    %468 = vmatpush.msra.mxu0 0.0
    %469 = vmatpush.msra.mxu0 %v362
    %470 = vmatpush.msra.mxu0 %v361
    %471 = vmatpush.msra.mxu0 %v360
    %472 = vmatpush.msra.mxu0 %v359
    %473 = vmatmul.f32.gmra.mxu0 %v455
    %v474 = vpop.f32.mrf.mxu0
    %v475 = vadd.f32 0.0, %v474
    %476 = vdwg.mxu0
    %v478 = vrot.slane %v475, 4
    %v480 = vadd.f32 %v393, %v478
    %v481 = vtanh.pop %v480
    %v483 = vrot.slane %v481, 4
    %v484 = vsel %vm118, %v483, 0
    %486 = vmatpush.msra.mxu0 0.0
    %487 = vmatpush.msra.mxu0 0.0
    %488 = vmatpush.msra.mxu0 0.0
    %489 = vmatpush.msra.mxu0 0.0
    %490 = vmatpush.msra.mxu0 0.0
    %491 = vmatpush.msra.mxu0 0.0
    %492 = vmatpush.msra.mxu0 0.0
    %493 = vmatpush.msra.mxu0 0.0
    %494 = vmatpush.msra.mxu0 0.0
    %495 = vmatpush.msra.mxu0 0.0
    %496 = vmatpush.msra.mxu0 0.0
    %497 = vmatpush.msra.mxu0 0.0
    %498 = vmatpush.msra.mxu0 %v362
    %499 = vmatpush.msra.mxu0 %v361
    %500 = vmatpush.msra.mxu0 %v360
    %501 = vmatpush.msra.mxu0 %v359
    %502 = vmatmul.f32.gmra.mxu0 %v484
    %v503 = vpop.f32.mrf.mxu0
    %v504 = vadd.f32 0.0, %v503
    %505 = vdwg.mxu0
    %v507 = vrot.slane %v504, 2
    %v509 = vadd.f32 %v393, %v507
    %v510 = vtanh.pop %v509
    %v512 = vrot.slane %v510, 6
    %v513 = vsel %vm118, %v512, 0
    %515 = vmatpush.msra.mxu0 0.0
    %516 = vmatpush.msra.mxu0 0.0
    %517 = vmatpush.msra.mxu0 0.0
    %518 = vmatpush.msra.mxu0 0.0
    %519 = vmatpush.msra.mxu0 0.0
    %520 = vmatpush.msra.mxu0 0.0
    %521 = vmatpush.msra.mxu0 0.0
    %522 = vmatpush.msra.mxu0 0.0
    %523 = vmatpush.msra.mxu0 0.0
    %524 = vmatpush.msra.mxu0 0.0
    %525 = vmatpush.msra.mxu0 0.0
    %526 = vmatpush.msra.mxu0 0.0
    %527 = vmatpush.msra.mxu0 %v362
    %528 = vmatpush.msra.mxu0 %v361
    %529 = vmatpush.msra.mxu0 %v360
    %530 = vmatpush.msra.mxu0 %v359
    %531 = vmatmul.f32.gmra.mxu0 %v513
    %v532 = vpop.f32.mrf.mxu0
    %v533 = vadd.f32 0.0, %v532
    %534 = vdwg.mxu0
    %v535 = vadd.f32 %v396, %v533
    %v536 = vtanh.pop %v535
    %v538 = vsel %vm118, %v536, 0
    %540 = vmatpush.msra.mxu0 0.0
    %541 = vmatpush.msra.mxu0 0.0
    %542 = vmatpush.msra.mxu0 0.0
    %543 = vmatpush.msra.mxu0 0.0
    %544 = vmatpush.msra.mxu0 0.0
    %545 = vmatpush.msra.mxu0 0.0
    %546 = vmatpush.msra.mxu0 0.0
    %547 = vmatpush.msra.mxu0 0.0
    %548 = vmatpush.msra.mxu0 0.0
    %549 = vmatpush.msra.mxu0 0.0
    %550 = vmatpush.msra.mxu0 0.0
    %551 = vmatpush.msra.mxu0 0.0
    %552 = vmatpush.msra.mxu0 %v362
    %553 = vmatpush.msra.mxu0 %v361
    %554 = vmatpush.msra.mxu0 %v360
    %555 = vmatpush.msra.mxu0 %v359
    %556 = vmatmul.f32.gmra.mxu0 %v538
    %v557 = vpop.f32.mrf.mxu0
    %v558 = vadd.f32 0.0, %v557
    %559 = vdwg.mxu0
    %v561 = vrot.slane %v558, 6
    %v563 = vadd.f32 %v396, %v561
    %v564 = vtanh.pop %v563
    %v566 = vrot.slane %v564, 2
    %v567 = vsel %vm118, %v566, 0
    %569 = vmatpush.msra.mxu0 0.0
    %570 = vmatpush.msra.mxu0 0.0
    %571 = vmatpush.msra.mxu0 0.0
    %572 = vmatpush.msra.mxu0 0.0
    %573 = vmatpush.msra.mxu0 0.0
    %574 = vmatpush.msra.mxu0 0.0
    %575 = vmatpush.msra.mxu0 0.0
    %576 = vmatpush.msra.mxu0 0.0
    %577 = vmatpush.msra.mxu0 0.0
    %578 = vmatpush.msra.mxu0 0.0
    %579 = vmatpush.msra.mxu0 0.0
    %580 = vmatpush.msra.mxu0 0.0
    %581 = vmatpush.msra.mxu0 %v362
    %582 = vmatpush.msra.mxu0 %v361
    %583 = vmatpush.msra.mxu0 %v360
    %584 = vmatpush.msra.mxu0 %v359
    %585 = vmatmul.f32.gmra.mxu0 %v567
    %v586 = vpop.f32.mrf.mxu0
    %v587 = vadd.f32 0.0, %v586
    %588 = vdwg.mxu0
    %v590 = vrot.slane %v587, 4
    %v592 = vadd.f32 %v396, %v590
    %v593 = vtanh.pop %v592
    %v595 = vrot.slane %v593, 4
    %v596 = vsel %vm118, %v595, 0
    %598 = vmatpush.msra.mxu0 0.0
    %599 = vmatpush.msra.mxu0 0.0
    %600 = vmatpush.msra.mxu0 0.0
    %601 = vmatpush.msra.mxu0 0.0
    %602 = vmatpush.msra.mxu0 0.0
    %603 = vmatpush.msra.mxu0 0.0
    %604 = vmatpush.msra.mxu0 0.0
    %605 = vmatpush.msra.mxu0 0.0
    %606 = vmatpush.msra.mxu0 0.0
    %607 = vmatpush.msra.mxu0 0.0
    %608 = vmatpush.msra.mxu0 0.0
    %609 = vmatpush.msra.mxu0 0.0
    %610 = vmatpush.msra.mxu0 %v362
    %611 = vmatpush.msra.mxu0 %v361
    %612 = vmatpush.msra.mxu0 %v360
    %613 = vmatpush.msra.mxu0 %v359
    %614 = vmatmul.f32.gmra.mxu0 %v596
    %v615 = vpop.f32.mrf.mxu0
    %v616 = vadd.f32 0.0, %v615
    %617 = vdwg.mxu0
    %v619 = vrot.slane %v616, 2
    %v621 = vadd.f32 %v396, %v619
    %v622 = vtanh.pop %v621
    %s623 = scalar_lea.vmem [#allocation9], 2
    %624 = vst.msk [vmem:[%s623 - $0x6] sm:$0xc0] %vm236, %v622
    %v625 = vmax.f32 %v622, 0.0
    %v626 = vld [vmem:[%s8] sm:$0xff]
    %v627 = vld [vmem:[%s8 + $0x8] sm:$0xff]
    %v628 = vld [vmem:[%s8 + $0x10] sm:$0xff]
    %v629 = vld [vmem:[%s8 + $0x18] sm:$0xff]
    %v630 = vld [vmem:[#allocation3] sm:$0x1]
    %v632 = vperm.slane %v630, 0
    %v635 = vrot.slane %v625, 6
    %v636 = vsel %vm118, %v635, 0
    %638 = vmatpush.msra.mxu0 0.0
    %639 = vmatpush.msra.mxu0 0.0
    %640 = vmatpush.msra.mxu0 0.0
    %641 = vmatpush.msra.mxu0 0.0
    %642 = vmatpush.msra.mxu0 0.0
    %643 = vmatpush.msra.mxu0 0.0
    %644 = vmatpush.msra.mxu0 0.0
    %645 = vmatpush.msra.mxu0 0.0
    %646 = vmatpush.msra.mxu0 0.0
    %647 = vmatpush.msra.mxu0 0.0
    %648 = vmatpush.msra.mxu0 0.0
    %649 = vmatpush.msra.mxu0 0.0
    %650 = vmatpush.msra.mxu0 %v629
    %651 = vmatpush.msra.mxu0 %v628
    %652 = vmatpush.msra.mxu0 %v627
    %653 = vmatpush.msra.mxu0 %v626
    %654 = vmatmul.f32.gmra.mxu0 %v636
    %v655 = vpop.f32.mrf.mxu0
    %v656 = vadd.f32 %v632, %v655
    %657 = vdwg.mxu0
    %vm658 = vcmask 1024
    %659 = vst.msk [vmem:[%s10] sm:$0x3] %vm658, %v656
    // Predicated region
    $region50: #{rnn_net_forward.1} parent=1 // pred_check
      _
    $region51: #{rnn_net_forward.1} parent=1 // pred_check_branch
      %661 = sbr.rel (0) target = $region53
    $region52: #{rnn_net_forward.1} parent=1 // pred_region
      _
    $region53: #{rnn_net_forward.1} parent=1 // pred_fallthru
      _
    // Predicated region
    $region54: #{rnn_net_forward.1} parent=1 // pred_check
      _
    $region55: #{rnn_net_forward.1} parent=1 // pred_check_branch
      %663 = sbr.rel (0) target = $region57
    $region56: #{rnn_net_forward.1} parent=1 // pred_region
      %665 = vsyncadd [#allocation6], 0
      %s666 = sshll.u32 [#allocation9], 4
      %s667 = int_to_ptr.vmem [resolvable:$true] %s666
      %s668 = sshll.u32 %s11, 4
      %s669 = int_to_ptr.hbm [resolvable:$true] %s668
      %674 = dma.vmem_to_hbm [thread:$0]  %s667, 64, %s669, [#allocation6], 32, 32, 2
    $region57: #{rnn_net_forward.1} parent=1 // pred_fallthru
      _
    // Predicated region
    $region58: #{rnn_net_forward.1} parent=1 // pred_check
      _
    $region59: #{rnn_net_forward.1} parent=1 // pred_check_branch
      %676 = sbr.rel (0) target = $region61
    $region60: #{rnn_net_forward.1} parent=1 // pred_region
      _
    $region61: #{rnn_net_forward.1} parent=1 // pred_fallthru
      _
    // Predicated region
    $region62: #{rnn_net_forward.1} parent=1 // pred_check
      _
    $region63: #{rnn_net_forward.1} parent=1 // pred_check_branch
      %678 = sbr.rel (0) target = $region65
    $region64: #{rnn_net_forward.1} parent=1 // pred_region
      %680 = dma.done [#allocation6], 64
    $region65: #{rnn_net_forward.1} parent=1 // pred_fallthru
      _
    %681 = vsyncpa [#allocation5], 1
    %682 = vsyncpa [#allocation8], 1
    %683 = vsyncpa [#allocation6], 1

</llo_original>
